<compile_context>
chip_gen: v7x
topology: tpu7x:2x2x1
jax: 0.10.0
libtpu: 0.0.40
codegen_flags: <defaults>
</compile_context>

<pallas_src>
import jax
import jax.numpy as jnp
from jax.experimental import pallas as pl
from jax.experimental.pallas import tpu as pltpu


def _round_up(x, m):
    return (x + m - 1) // m * m


def _physical_vmem_bytes():
    # Trace-time hardware query; conservative fallback = v7x per-TC VMEM (64 MiB).
    try:
        info = pltpu.get_tpu_info()
        v = getattr(info, "vmem_capacity_bytes", None)
        if v:
            return int(v)
    except Exception:
        pass
    return 64 * 1024 * 1024


def value_head_kernel(x_ref, w1_ref, b1_ref, w2_ref, out_ref, acc_ref):
    # x_ref:  (TB, H)    bf16 pooled hidden rows (block index constant across n)
    # w1_ref: (H, TN)    bf16 first-layer weight tile
    # b1_ref: (1, TN)    f32  first-layer bias tile
    # w2_ref: (1, TN)    f32  second-layer weight row tile
    # out_ref:(1, TB, 1) f32  partial value for this (split, batch-tile)
    # acc_ref:(TB, 1)    f32  accumulator across N tiles of this split
    n = pl.program_id(2)

    @pl.when(n == 0)
    def _():
        acc_ref[...] = jnp.zeros_like(acc_ref)

    # MXU matmul with f32 accumulation; bias + ReLU in f32 on the VPU (v5e has no bf16 VPU).
    h1 = jnp.dot(x_ref[...], w1_ref[...], preferred_element_type=jnp.float32)
    h1 = jnp.maximum(h1 + b1_ref[...], 0.0)

    # Second layer as VPU multiply + cross-lane reduce: the kernel is DMA-bound, so the
    # VPU/XLU slots are free; avoids a degenerate 1-output-column MXU op.
    acc_ref[...] += jnp.sum(h1 * w2_ref[...], axis=-1, keepdims=True)

    @pl.when(n == pl.num_programs(2) - 1)
    def _():
        out_ref[0, :, :] = acc_ref[...]


def prepare_value_head(w1t, b1, w2t, b2, *, max_batch_tile=256, tn_cap=2048):
    """One-time (load-time) param prep: bf16 cast, 2H padding, tiling plan.

    w1t: (H, 2H) pre-transposed first Linear weight; b1: (2H,) or (1, 2H);
    w2t: (2H, 1) pre-transposed second Linear weight; b2: scalar-shaped bias.
    """
    H, H2 = w1t.shape

    phys_vmem = _physical_vmem_bytes()
    # Leave headroom under physical VMEM (v7x: 64 MiB physical -> 48 MiB limit;
    # v5e/v6e: 128 MiB physical -> 96 MiB limit, well above the low default scoped limits).
    vmem_limit_bytes = int(min((phys_vmem * 3) // 4, 100 * 1024 * 1024))

    # Split the 2H reduction across 2 "parallel" grid slots (v7x has 2 TensorCores).
    h2_128 = _round_up(H2, 128)
    tiles128 = h2_128 // 128
    num_splits = 2 if tiles128 >= 2 else 1
    per_split_cols = (_round_up(tiles128, num_splits) // num_splits) * 128

    # VMEM budget -> TN cap: double-buffered bf16 w1 column + f32 b1/w2 rows, after
    # accounting for the (double-buffered) x block, accumulator and headroom.
    bytes_per_col = 2 * (H * 2 + 4 + 4)
    x_bytes = 2 * max_batch_tile * H * 2
    misc_bytes = max_batch_tile * 4 * 4 + 2 * 1024 * 1024
    budget = max(vmem_limit_bytes - x_bytes - misc_bytes, bytes_per_col * 128)
    cap = max(128, min(tn_cap, (budget // bytes_per_col) // 128 * 128))

    # Pick TN minimizing streamed (padded) weight bytes first, then the grid step count.
    best = None
    for tn_cand in range(128, cap + 1, 128):
        padded = _round_up(per_split_cols, tn_cand)
        key = (padded, padded // tn_cand)
        if best is None or key < best[0]:
            best = (key, tn_cand)
    tn = best[1]
    per_split_cols = _round_up(per_split_cols, tn)
    n_per_split = per_split_cols // tn
    h2_pad = per_split_cols * num_splits

    pad_cols = h2_pad - H2
    # Padded columns have b1 = 0 and w2 = 0, so they contribute exactly 0 to the output.
    w1_bf = jnp.pad(w1t.astype(jnp.bfloat16), ((0, 0), (0, pad_cols)))
    b1_f = jnp.pad(jnp.reshape(b1, (1, H2)).astype(jnp.float32), ((0, 0), (0, pad_cols)))
    w2_f = jnp.pad(jnp.reshape(w2t, (1, H2)).astype(jnp.float32), ((0, 0), (0, pad_cols)))
    b2_f = jnp.reshape(b2, ()).astype(jnp.float32)

    return dict(w1=w1_bf, b1=b1_f, w2=w2_f, b2=b2_f,
                H=H, H2=H2, H2_pad=h2_pad, tn=tn,
                num_splits=num_splits, n_per_split=n_per_split,
                max_batch_tile=max_batch_tile,
                vmem_limit_bytes=vmem_limit_bytes)


def value_function_forward(last_hidden, attention_mask, head):
    """Pool last non-pad token hidden state, apply value head. Returns (B,) f32."""
    B, S, H = last_hidden.shape
    assert H == head["H"]

    # seq_lens = attention_mask.sum(-1) - 1 (right padding). `% S` reproduces PyTorch's
    # negative-index gather for degenerate all-padding rows (index -1 -> position S-1).
    if attention_mask is not None:
        seq_lens = attention_mask.sum(axis=1).astype(jnp.int32) - 1
    else:
        seq_lens = jnp.full((B,), S - 1, dtype=jnp.int32)
    seq_lens = seq_lens % S

    # Pooled rows gathered once in XLA (tiny B x H tensor).
    pooled = jnp.take_along_axis(last_hidden, seq_lens[:, None, None], axis=1)[:, 0, :]

    # Pad batch to a bf16-sublane-friendly size; tile batch only if it exceeds the cap.
    TB_cap = head["max_batch_tile"]
    B_pad = _round_up(max(B, 1), 16)
    if B_pad > TB_cap:
        TB = TB_cap
        B_pad = _round_up(B, TB_cap)
        # TODO(synk): with multiple batch tiles the (H, 2H) weight is re-streamed per
        # batch tile; large-batch callers should raise max_batch_tile in prepare_value_head.
    else:
        TB = B_pad
    pooled = jnp.pad(pooled.astype(jnp.bfloat16), ((0, B_pad - B), (0, 0)))

    ns = head["num_splits"]
    nps = head["n_per_split"]
    tn = head["tn"]

    col_map = lambda c, b, n: (0, c * nps + n)
    grid = (ns, B_pad // TB, nps)

    partials = pl.pallas_call(
        value_head_kernel,
        out_shape=jax.ShapeDtypeStruct((ns, B_pad, 1), jnp.float32),
        grid_spec=pltpu.PrefetchScalarGridSpec(
            num_scalar_prefetch=0,
            grid=grid,
            in_specs=[
                pl.BlockSpec((TB, H), lambda c, b, n: (b, 0)),
                pl.BlockSpec((H, tn), col_map),
                pl.BlockSpec((1, tn), col_map),
                pl.BlockSpec((1, tn), col_map),
            ],
            out_specs=pl.BlockSpec((1, TB, 1), lambda c, b, n: (c, b, 0)),
            scratch_shapes=[pltpu.VMEM((TB, 1), jnp.float32)],
        ),
        compiler_params=pltpu.CompilerParams(
            dimension_semantics=("parallel", "parallel", "arbitrary"),
            vmem_limit_bytes=head["vmem_limit_bytes"]),
    )(pooled, head["w1"], head["b1"], head["w2"])

    # Sum the per-split partial reductions, drop batch padding, fold b2, squeeze(-1).
    return partials.sum(axis=0)[:B, 0] + head["b2"]


def reference_forward(last_hidden, attention_mask, w1t, b1, w2t, b2):
    """Pure-JAX reference with matching precision (bf16 first matmul, f32 second layer)."""
    B, S, H = last_hidden.shape
    if attention_mask is not None:
        seq_lens = attention_mask.sum(axis=1).astype(jnp.int32) - 1
    else:
        seq_lens = jnp.full((B,), S - 1, dtype=jnp.int32)
    seq_lens = seq_lens % S
    pooled = last_hidden[jnp.arange(B), seq_lens]                       # (B, H)
    h1 = jnp.dot(pooled.astype(jnp.bfloat16), w1t.astype(jnp.bfloat16),
                 preferred_element_type=jnp.float32)
    h1 = jnp.maximum(h1 + jnp.reshape(b1, (1, -1)).astype(jnp.float32), 0.0)
    v = jnp.sum(h1 * jnp.reshape(w2t, (1, -1)).astype(jnp.float32), axis=-1)
    return v + jnp.reshape(b2, ()).astype(jnp.float32)


if __name__ == "__main__":
    # Small synthetic shapes consistent with the module's forward.
    B, S, H, VOCAB = 2, 8, 32, 64
    H2 = 2 * H

    key = jax.random.PRNGKey(0)
    k_emb, k_ids, k_w1, k_w2 = jax.random.split(key, 4)

    # Stand-in "base model": deterministic token embedding table.
    # TODO(synk): full pretrained transformer forward not reproduced.
    embed_table = jax.random.normal(k_emb, (VOCAB, H), dtype=jnp.float32)
    input_ids = jax.random.randint(k_ids, (B, S), 0, VOCAB, dtype=jnp.int32)

    # Right-padded attention mask (padding_side='right'), lengths [8, 5].
    lengths = jnp.array([S, 5], dtype=jnp.int32)
    attention_mask = (jnp.arange(S)[None, :] < lengths[:, None]).astype(jnp.int32)

    # Value head params: kaiming_normal_(mode='fan_in', nonlinearity='linear')
    # => std = 1/sqrt(fan_in); biases zero. Stored pre-transposed (in, out).
    w1t = jax.random.normal(k_w1, (H, H2), dtype=jnp.float32) / jnp.sqrt(H)
    b1 = jnp.zeros((H2,), dtype=jnp.float32)
    w2t = jax.random.normal(k_w2, (H2, 1), dtype=jnp.float32) / jnp.sqrt(H2)
    b2 = jnp.zeros((1,), dtype=jnp.float32)

    # "last_hidden = base_model(input_ids).hidden_states[-1]" stand-in.
    last_hidden = embed_table[input_ids]   # (B, S, H)

    # One-time (load-time) value-head param prep: bf16 cast / padding / tiling plan.
    head = prepare_value_head(w1t, b1, w2t, b2)

    out = value_function_forward(last_hidden, attention_mask, head)
    out = jax.block_until_ready(out)

    ref = reference_forward(last_hidden, attention_mask, w1t, b1, w2t, b2)
    assert out.shape == (B,)
    assert jnp.allclose(out, ref, atol=1e-2, rtol=1e-2), (out, ref)

    print("KERNEL_OK")
</pallas_src>

<mosaic_0001>
module attributes {stable_mosaic.version = 11 : i64} {
  func.func @value_head_kernel(%arg0: i32, %arg1: i32, %arg2: i32, %arg3: memref<16x32xbf16, #tpu.memory_space<vmem>>, %arg4: memref<32x128xbf16, #tpu.memory_space<vmem>>, %arg5: memref<1x128xf32, #tpu.memory_space<vmem>>, %arg6: memref<1x128xf32, #tpu.memory_space<vmem>>, %arg7: memref<1x16x1xf32, #tpu.memory_space<vmem>>, %arg8: memref<16x1xf32, #tpu.memory_space<vmem>>) attributes {dimension_semantics = [#tpu.dimension_semantics<parallel>, #tpu.dimension_semantics<parallel>, #tpu.dimension_semantics<arbitrary>], iteration_bounds = array<i64: 1, 1, 1>, scalar_prefetch = 0 : i64, scratch_operands = 1 : i64, tpu.core_type = #tpu.core_type<tc>, window_params = [{transform_indices = @transform_0, window_bounds = array<i64: 16, 32>}, {transform_indices = @transform_1, window_bounds = array<i64: 32, 128>}, {transform_indices = @transform_2, window_bounds = array<i64: 1, 128>}, {transform_indices = @transform_3, window_bounds = array<i64: 1, 128>}, {transform_indices = @transform_4, window_bounds = array<i64: 1, 16, 1>}]} {
    %c0_i32 = arith.constant 0 : i32
    %0 = arith.cmpi eq, %arg2, %c0_i32 : i32
    %1 = arith.extui %0 : i1 to i32
    %c0_i32_0 = arith.constant 0 : i32
    %2 = arith.cmpi ne, %1, %c0_i32_0 : i32
    scf.if %2 {
      %cst_16 = arith.constant 0.000000e+00 : f32
      %22 = vector.broadcast %cst_16 : f32 to vector<16x1xf32>
      %c0_17 = arith.constant 0 : index
      %c0_18 = arith.constant 0 : index
      %23 = vector.load %arg8[%c0_17, %c0_18] : memref<16x1xf32, #tpu.memory_space<vmem>>, vector<16x1xf32>
      tpu.vector_store %arg8[%c0_17, %c0_18], %22 {strides = array<i32>} : memref<16x1xf32, #tpu.memory_space<vmem>>, vector<16x1xf32>,
    } else {
    }
    %c0 = arith.constant 0 : index
    %c0_1 = arith.constant 0 : index
    %3 = vector.load %arg3[%c0, %c0_1] : memref<16x32xbf16, #tpu.memory_space<vmem>>, vector<16x32xbf16>
    %c0_2 = arith.constant 0 : index
    %c0_3 = arith.constant 0 : index
    %4 = vector.load %arg4[%c0_2, %c0_3] : memref<32x128xbf16, #tpu.memory_space<vmem>>, vector<32x128xbf16>
    %cst = arith.constant dense<0.000000e+00> : vector<16x128xf32>
    %5 = tpu.matmul %3, %4, %cst {dimension_numbers = #tpu.dot_dimension_numbers<[1], [0], [0], [1], [0, 0, 1, 1], [], []>} : vector<16x32xbf16>, vector<32x128xbf16>, vector<16x128xf32> -> vector<16x128xf32>
    %c0_4 = arith.constant 0 : index
    %c0_5 = arith.constant 0 : index
    %6 = vector.load %arg5[%c0_4, %c0_5] : memref<1x128xf32, #tpu.memory_space<vmem>>, vector<1x128xf32>
    %7 = vector.broadcast %6 : vector<1x128xf32> to vector<16x128xf32>
    %8 = arith.addf %5, %7 : vector<16x128xf32>
    %cst_6 = arith.constant 0.000000e+00 : f32
    %9 = vector.broadcast %cst_6 : f32 to vector<16x128xf32>
    %10 = arith.maximumf %8, %9 : vector<16x128xf32>
    %c0_7 = arith.constant 0 : index
    %c0_8 = arith.constant 0 : index
    %11 = vector.load %arg8[%c0_7, %c0_8] : memref<16x1xf32, #tpu.memory_space<vmem>>, vector<16x1xf32>
    %c0_9 = arith.constant 0 : index
    %c0_10 = arith.constant 0 : index
    %12 = vector.load %arg6[%c0_9, %c0_10] : memref<1x128xf32, #tpu.memory_space<vmem>>, vector<1x128xf32>
    %13 = vector.broadcast %12 : vector<1x128xf32> to vector<16x128xf32>
    %14 = arith.mulf %10, %13 : vector<16x128xf32>
    %cst_11 = arith.constant dense<0.000000e+00> : vector<16xf32>
    %15 = vector.multi_reduction <add>, %14, %cst_11 [1] : vector<16x128xf32> to vector<16xf32>
    %16 = vector.shape_cast %15 : vector<16xf32> to vector<16x1xf32>
    %17 = arith.addf %11, %16 : vector<16x1xf32>
    %c0_12 = arith.constant 0 : index
    %c0_13 = arith.constant 0 : index
    %18 = vector.load %arg8[%c0_12, %c0_13] : memref<16x1xf32, #tpu.memory_space<vmem>>, vector<16x1xf32>
    tpu.vector_store %arg8[%c0_12, %c0_13], %17 {strides = array<i32>} : memref<16x1xf32, #tpu.memory_space<vmem>>, vector<16x1xf32>,
    %c0_i32_14 = arith.constant 0 : i32
    %19 = arith.cmpi eq, %arg2, %c0_i32_14 : i32
    %20 = arith.extui %19 : i1 to i32
    %c0_i32_15 = arith.constant 0 : i32
    %21 = arith.cmpi ne, %20, %c0_i32_15 : i32
    scf.if %21 {
      %c0_16 = arith.constant 0 : index
      %c0_17 = arith.constant 0 : index
      %22 = vector.load %arg8[%c0_16, %c0_17] : memref<16x1xf32, #tpu.memory_space<vmem>>, vector<16x1xf32>
      %c0_18 = arith.constant 0 : index
      %c0_19 = arith.constant 0 : index
      %c0_20 = arith.constant 0 : index
      %23 = vector.load %arg7[%c0_18, %c0_19, %c0_20] : memref<1x16x1xf32, #tpu.memory_space<vmem>>, vector<1x16x1xf32>
      %24 = vector.shape_cast %23 : vector<1x16x1xf32> to vector<16x1xf32>
      %25 = vector.shape_cast %22 : vector<16x1xf32> to vector<1x16x1xf32>
      tpu.vector_store %arg7[%c0_18, %c0_19, %c0_20], %25 {strides = array<i32>} : memref<1x16x1xf32, #tpu.memory_space<vmem>>, vector<1x16x1xf32>,
    } else {
    }
    return
  }
  func.func @transform_0(%arg0: i32, %arg1: i32, %arg2: i32) -> (i32, i32) {
    %c0_i32 = arith.constant 0 : i32
    %c0_i32_0 = arith.constant 0 : i32
    return %arg1, %c0_i32 : i32, i32
  }
  func.func @transform_1(%arg0: i32, %arg1: i32, %arg2: i32) -> (i32, i32) {
    %c1_i32 = arith.constant 1 : i32
    %0 = arith.muli %arg0, %c1_i32 : i32
    %1 = arith.addi %0, %arg2 : i32
    %c0_i32 = arith.constant 0 : i32
    %c0_i32_0 = arith.constant 0 : i32
    return %c0_i32, %1 : i32, i32
  }
  func.func @transform_2(%arg0: i32, %arg1: i32, %arg2: i32) -> (i32, i32) {
    %c1_i32 = arith.constant 1 : i32
    %0 = arith.muli %arg0, %c1_i32 : i32
    %1 = arith.addi %0, %arg2 : i32
    %c0_i32 = arith.constant 0 : i32
    %c0_i32_0 = arith.constant 0 : i32
    return %c0_i32, %1 : i32, i32
  }
  func.func @transform_3(%arg0: i32, %arg1: i32, %arg2: i32) -> (i32, i32) {
    %c1_i32 = arith.constant 1 : i32
    %0 = arith.muli %arg0, %c1_i32 : i32
    %1 = arith.addi %0, %arg2 : i32
    %c0_i32 = arith.constant 0 : i32
    %c0_i32_0 = arith.constant 0 : i32
    return %c0_i32, %1 : i32, i32
  }
  func.func @transform_4(%arg0: i32, %arg1: i32, %arg2: i32) -> (i32, i32, i32) {
    %c0_i32 = arith.constant 0 : i32
    %c0_i32_0 = arith.constant 0 : i32
    return %arg0, %arg1, %c0_i32 : i32, i32, i32
  }
}

</mosaic_0001>

<llo_original>
// kernel: tpu_custom_call.1
$region0: #{tpu_custom_call.1}
  #allocation0 [shape = 'u32[]', space=smem, size = 0x4, offset = 0x4, fixed_abs, tag = 'smem constant byte address 0x4 - core index']
  #allocation1 [shape = 'u32[144,128]{1,0:T(1,128)}', space=vmem, size = 0x12000, scoped, tag = 'internal scratch']
  #allocation2 [shape = 'f32[16,1]{1,0:T(8,128)}', space=vmem, size = 0x2000, scoped, tag = 'scratch operand']
  %s0 = inlined_call_operand.hbm [shape: bf16[16,32], index: 0, kind: input, shape index: {}]
  %s1 = inlined_call_operand.hbm [shape: bf16[32,128], index: 1, kind: input, shape index: {}]
  %s2 = inlined_call_operand.vmem [shape: f32[1,128], index: 2, kind: input, shape index: {}]
  %s3 = inlined_call_operand.vmem [shape: f32[1,128], index: 3, kind: input, shape index: {}]
  %s4 = inlined_call_operand.vmem [shape: f32[1,16,1], index: 4, kind: output, shape index: {}]
  %s5 = sld [smem:[#allocation0]]
  $region42: #{tpu_custom_call.1} parent=0
    _
  %s7 = ssub.s32 1, %s5
  %s8 = scalar_select 0, %s7, %s5
  $region1: #{tpu_custom_call.1} parent=0
    #allocation3 [shape = 'u8[4096]{0}', space=vmem, size = 0x1000, scoped, tag = 'input window, operand 0, single buffered']
    #allocation4 [shape = 's32[1]{0}', space=sflag, size = 0x4, scoped, tag = 'scoped memory for tpu_custom_call.1']
    #allocation5 [shape = 'u8[8192]{0}', space=vmem, size = 0x2000, scoped, tag = 'input window, operand 1, single buffered']
    #allocation6 [shape = 's32[1]{0}', space=sflag, size = 0x4, scoped, tag = 'scoped memory for tpu_custom_call.1']
    %9 = vsyncpa [#allocation4], 0
    %10 = vsyncpa [#allocation6], 0
    // Predicated region
    $region2: #{tpu_custom_call.1} parent=1 // pred_check
      _
    $region3: #{tpu_custom_call.1} parent=1 // pred_check_branch
      %12 = sbr.rel (0) target = $region5
    $region4: #{tpu_custom_call.1} parent=1 // pred_region
      %s14 = ssub.s32 128, 128
      %15 = vsyncadd [#allocation4], %s14
      %s16 = sshll.u32 [#allocation3], 4
      %s17 = int_to_ptr.vmem [resolvable:$true] %s16
      %22 = dma.hbm_to_vmem [thread:$0]  %s0, 128, %s17, [#allocation4], 64, 64, 4
    $region5: #{tpu_custom_call.1} parent=1 // pred_fallthru
      _
    // Predicated region
    $region6: #{tpu_custom_call.1} parent=1 // pred_check
      _
    $region7: #{tpu_custom_call.1} parent=1 // pred_check_branch
      %24 = sbr.rel (0) target = $region9
    $region8: #{tpu_custom_call.1} parent=1 // pred_region
      %s25 = sadd.s32 0, 0
      %s27 = ssub.s32 256, 256
      %28 = vsyncadd [#allocation6], %s27
      %s29 = smul.addr %s25, 64
      %s30 = scalar_lea.hbm %s1, %s29
      %s31 = sshll.u32 [#allocation5], 4
      %s32 = int_to_ptr.vmem [resolvable:$true] %s31
      %37 = dma.hbm_to_vmem [thread:$0]  %s30, 256, %s32, [#allocation6], 64, 64, 4
    $region9: #{tpu_custom_call.1} parent=1 // pred_fallthru
      _
    // Predicated region
    $region10: #{tpu_custom_call.1} parent=1 // pred_check
      _
    $region11: #{tpu_custom_call.1} parent=1 // pred_check_branch
      %39 = sbr.rel (0) target = $region13
    $region12: #{tpu_custom_call.1} parent=1 // pred_region
      %s40 = sadd.s32 0, 0
      %p41 = scmp.lt.s32.totalorder %s40, 0
      %s42 = scalar_select %p41, %s40, 0
      %s43 = scalar_lea.vmem %s2, %s42
      %s44 = sadd.s32 0, 0
    $region13: #{tpu_custom_call.1} parent=1 // pred_fallthru
      _
    // Predicated region
    $region14: #{tpu_custom_call.1} parent=1 // pred_check
      _
    $region15: #{tpu_custom_call.1} parent=1 // pred_check_branch
      %46 = sbr.rel (0) target = $region17
    $region16: #{tpu_custom_call.1} parent=1 // pred_region
      %s47 = sadd.s32 0, 0
      %p48 = scmp.lt.s32.totalorder %s47, 0
      %s49 = scalar_select %p48, %s47, 0
      %s50 = scalar_lea.vmem %s3, %s49
      %s51 = sadd.s32 0, 0
    $region17: #{tpu_custom_call.1} parent=1 // pred_fallthru
      _
    // Predicated region
    $region18: #{tpu_custom_call.1} parent=1 // pred_check
      _
    $region19: #{tpu_custom_call.1} parent=1 // pred_check_branch
      %53 = sbr.rel (0) target = $region21
    $region20: #{tpu_custom_call.1} parent=1 // pred_region
      %54 = dma.done [#allocation4], 128
    $region21: #{tpu_custom_call.1} parent=1 // pred_fallthru
      _
    // Predicated region
    $region22: #{tpu_custom_call.1} parent=1 // pred_check
      _
    $region23: #{tpu_custom_call.1} parent=1 // pred_check_branch
      %56 = sbr.rel (0) target = $region25
    $region24: #{tpu_custom_call.1} parent=1 // pred_region
      %57 = dma.done [#allocation6], 256
    $region25: #{tpu_custom_call.1} parent=1 // pred_fallthru
      _
    %s58 = sadd.s32 0, 0
    %p59 = scmp.lt.s32.totalorder %s58, 0
    %s60 = scalar_select %p59, %s58, 0
    %s61 = scalar_lea.vmem %s2, %s60
    %s62 = sadd.s32 0, 0
    %p63 = scmp.lt.s32.totalorder %s62, 0
    %s64 = scalar_select %p63, %s62, 0
    %s65 = scalar_lea.vmem %s3, %s64
    %s66 = sadd.s32 0, 0
    %s67 = sadd.s32 0, 0
    %p68 = scmp.lt.s32.totalorder %s67, 0
    %s69 = scalar_select %p68, %s67, 0
    %s70 = scalar_lea.vmem %s2, %s69
    %s71 = sadd.s32 0, 0
    %s72 = sadd.s32 0, 0
    %p73 = scmp.lt.s32.totalorder %s72, 0
    %s74 = scalar_select %p73, %s72, 0
    %s75 = scalar_lea.vmem %s3, %s74
    %s76 = sadd.s32 0, 0
    %p78 = scmp.eq.s32.totalorder 0, 0
    // Predicated region
    $region26: #{tpu_custom_call.1} parent=1 // pred_check
      %p79 = pneg %p78
    $region27: #{tpu_custom_call.1} parent=1 // pred_check_branch
      %81 = sbr.rel (%p79) target = $region29
    $region28: #{tpu_custom_call.1} parent=1 // pred_region
      %vm82 = vcmask 7168
      %83 = vst.msk [vmem:[#allocation2] sm:$0xff] %vm82, 0.0
      %84 = vst.msk [vmem:[#allocation2 + $0x8] sm:$0xff] %vm82, 0.0
    $region29: #{tpu_custom_call.1} parent=1 // pred_fallthru
      _
    %v85 = vld [vmem:[#allocation3] sm:$0xf]
    %v86 = vld [vmem:[#allocation3 + $0x4] sm:$0xf]
    %v87 = vld [vmem:[#allocation5] sm:$0xf]
    %v88 = vld [vmem:[#allocation5 + $0x4] sm:$0xf]
    %v89 = vld [vmem:[#allocation5 + $0x8] sm:$0xf]
    %v90 = vld [vmem:[#allocation5 + $0xc] sm:$0xf]
    %v91 = vld [vmem:[%s70] sm:$0x1]
    %v93 = vlaneseq
    %v94 = vshrl.u32 %v93, 7
    %v95 = vsub.s32 0, %v94
    %v96 = vrot.slane %v91, %v95
    %v100 = vunpack.c.l.b16 %v85
    %v101 = vunpack.c.l.b16 %v86
    %v102 = vpack.c.b16 %v101, %v100
    %v107 = vunpack.c.l.b16 %v87
    %v108 = vunpack.c.l.b16 %v88
    %v109 = vunpack.c.l.b16 %v89
    %v110 = vunpack.c.l.b16 %v90
    %v111 = vpack.c.b16 %v108, %v107
    %v112 = vpack.c.b16 %v110, %v109
    %vm115 = vcmask 261120
    %v117 = vsel %vm115, %v102, 0
    %119 = vmatprep.subr.bf16.mxu0 0
    %120 = vmatpush1.bf16.msra.mxu0 %v111
    %121 = vmatprep.subr.bf16.mxu0 0
    %122 = vmatpush1.bf16.msra.mxu0 %v112
    %123 = vmatprep.subr.bf16.mxu0 0
    %124 = vmatpush1.bf16.msra.mxu0 0
    %125 = vmatprep.subr.bf16.mxu0 0
    %126 = vmatpush1.bf16.msra.mxu0 0
    %127 = vmatprep.subr.bf16.mxu0 0
    %128 = vmatpush1.bf16.msra.mxu0 0
    %129 = vmatprep.subr.bf16.mxu0 0
    %130 = vmatpush1.bf16.msra.mxu0 0
    %131 = vmatprep.subr.bf16.mxu0 0
    %132 = vmatpush1.bf16.msra.mxu0 0
    %133 = vmatprep.subr.bf16.mxu0 0
    %134 = vmatpush1.bf16.msra.mxu0 0
    %135 = vmatprep.subr.bf16.mxu0 0
    %136 = vmatpush1.bf16.msra.mxu0 0
    %137 = vmatprep.subr.bf16.mxu0 0
    %138 = vmatpush1.bf16.msra.mxu0 0
    %139 = vmatprep.subr.bf16.mxu0 0
    %140 = vmatpush1.bf16.msra.mxu0 0
    %141 = vmatprep.subr.bf16.mxu0 0
    %142 = vmatpush1.bf16.msra.mxu0 0
    %143 = vmatprep.subr.bf16.mxu0 0
    %144 = vmatpush1.bf16.msra.mxu0 0
    %145 = vmatprep.subr.bf16.mxu0 0
    %146 = vmatpush1.bf16.msra.mxu0 0
    %147 = vmatprep.subr.bf16.mxu0 0
    %148 = vmatpush1.bf16.msra.mxu0 0
    %149 = vmatprep.subr.bf16.mxu0 0
    %150 = vmatpush1.bf16.msra.mxu0 0
    %151 = vmatprep.mubr.bf16.mxu0 0
    %152 = vmatmul.mubr.bf16.gmra.mrb[0].mxu0 %v117
    %v153 = vpop.f32.mrb[0].mxu0
    %v154 = vadd.f32 %v96, %v153
    %v155 = vpop.f32.mrb[0].mxu0
    %v156 = vpop.f32.mrb[0].mxu0
    %v157 = vadd.f32 %v96, %v156
    %v158 = vpop.f32.mrb[0].mxu0
    %159 = vdwg.mxu0
    %v160 = vmax.f32 %v154, 0.0
    %v161 = vmax.f32 %v157, 0.0
    %v162 = vld [vmem:[#allocation2] sm:$0xff]
    %v163 = vld [vmem:[#allocation2 + $0x8] sm:$0xff]
    %v164 = vld [vmem:[%s75] sm:$0x1]
    %v166 = vlaneseq
    %v167 = vshrl.u32 %v166, 7
    %v168 = vsub.s32 0, %v167
    %v169 = vrot.slane %v164, %v168
    %v171 = vmul.f32 %v160, %v169
    %v172 = vmul.f32 %v161, %v169
    %173 = vadd.xlane.f32.xlu0 %v171
    %v174 = vpop.xlane.xlu0 %173
    %175 = vadd.xlane.f32.xlu0 %v172
    %v176 = vpop.xlane.xlu0 %175
    %v177 = vadd.f32 %v162, %v174
    %v178 = vadd.f32 %v163, %v176
    %vm179 = vcmask 7168
    %180 = vst.msk [vmem:[#allocation2] sm:$0xff] %vm179, %v177
    %181 = vst.msk [vmem:[#allocation2 + $0x8] sm:$0xff] %vm179, %v178
    // Predicated region
    $region30: #{tpu_custom_call.1} parent=1 // pred_check
      %p182 = pneg %p78
    $region31: #{tpu_custom_call.1} parent=1 // pred_check_branch
      %184 = sbr.rel (%p182) target = $region33
    $region32: #{tpu_custom_call.1} parent=1 // pred_region
      %v185 = vld [vmem:[#allocation2] sm:$0xff]
      %v186 = vld [vmem:[#allocation2 + $0x8] sm:$0xff]
      %187 = vst.msk [vmem:[%s4] sm:$0xff] %vm179, %v185
      %188 = vst.msk [vmem:[%s4 + $0x8] sm:$0xff] %vm179, %v186
    $region33: #{tpu_custom_call.1} parent=1 // pred_fallthru
      _
    // Predicated region
    $region34: #{tpu_custom_call.1} parent=1 // pred_check
      _
    $region35: #{tpu_custom_call.1} parent=1 // pred_check_branch
      %190 = sbr.rel (0) target = $region37
    $region36: #{tpu_custom_call.1} parent=1 // pred_region
      _
    $region37: #{tpu_custom_call.1} parent=1 // pred_fallthru
      _
    // Predicated region
    $region38: #{tpu_custom_call.1} parent=1 // pred_check
      _
    $region39: #{tpu_custom_call.1} parent=1 // pred_check_branch
      %192 = sbr.rel (0) target = $region41
    $region40: #{tpu_custom_call.1} parent=1 // pred_region
      _
    $region41: #{tpu_custom_call.1} parent=1 // pred_fallthru
      _
    %193 = vsyncpa [#allocation4], 1
    %194 = vsyncpa [#allocation6], 1

</llo_original>
